<compile_context>
chip_gen: v5e
topology: v5e:2x2
jax: 0.10.0
libtpu: 0.0.40
codegen_flags: <defaults>
</compile_context>

<pallas_src>
import jax
import jax.numpy as jnp
from jax.experimental import pallas as pl
from jax.experimental.pallas import tpu as pltpu

_LANE_WIDTH = 1024            # lane-dense columns: large multiple of 128 -> unmasked vst
_ROW_TILE = 1024              # 1024 x 1024 f32 = 4 MiB per buffer
_MIN_PALLAS_ELEMENTS = 100_000  # below this, plain XLA elementwise is faster


def _relu_round_kernel(x_ref, o_ref):
    # ReLU then round-half-to-even (matches torch.round exactly).
    o_ref[...] = jnp.round(jnp.maximum(x_ref[...], 0.0))


def _round_up(n: int, m: int) -> int:
    return (n + m - 1) // m * m


def _choose_row_tile(rows: int) -> int:
    if rows <= 64:
        # Single full-extent block: block dims == array dims, so the (8, 128)
        # divisibility rule does not apply.
        return rows
    # At least 2 blocks (keeps both v7x TensorCores busy on medium inputs),
    # each a multiple of 8 sublanes, capped at the 4 MiB streaming tile.
    return min(_ROW_TILE, _round_up(pl.cdiv(rows, 2), 8))


def segmentation_toy_model(x: jax.Array, *, min_pallas_elements: int = _MIN_PALLAS_ELEMENTS) -> jax.Array:
    """Forward pass of SegmentationToyModel: round(relu(x)). Any shape/rank."""
    orig_shape = x.shape
    n = x.size

    # Tiny-input fast path: Pallas dispatch + layout plumbing would dominate.
    if n < min_pallas_elements:
        return jnp.round(jnp.maximum(x, 0.0))

    flat = x.reshape(-1)
    c = _LANE_WIDTH
    rows = n // c
    rem = n - rows * c

    if rows == 0:
        # Less than one lane-dense row: nothing worth a kernel launch.
        return jnp.round(jnp.maximum(x, 0.0))

    # Lane-dense aligned prefix; the tail (< 1024 elements) is handled below.
    main = (flat if rem == 0 else flat[: rows * c]).reshape(rows, c)

    r_tile = _choose_row_tile(rows)
    grid = (pl.cdiv(rows, r_tile),)  # partial last block is masked by Pallas

    itemsize = jnp.dtype(main.dtype).itemsize
    main_out = pl.pallas_call(
        _relu_round_kernel,
        out_shape=jax.ShapeDtypeStruct((rows, c), main.dtype),
        grid_spec=pltpu.PrefetchScalarGridSpec(
            num_scalar_prefetch=0,
            grid=grid,
            in_specs=[pl.BlockSpec((r_tile, c), lambda i: (i, 0))],
            out_specs=pl.BlockSpec((r_tile, c), lambda i: (i, 0)),
        ),
        compiler_params=pltpu.CompilerParams(
            # Every grid step is independent (2x lever on v7x's dual TCs).
            dimension_semantics=("parallel",),
            # 16 MiB of double-buffered tiles + headroom; explicit so the
            # 4 MiB tile is safe on v5e (16 MiB scoped default) and well under
            # v7x's 64 MiB physical VMEM.
            vmem_limit_bytes=32 * 1024 * 1024,
        ),
        # Shape/dtype-preserving elementwise op: reuse the input HBM buffer.
        input_output_aliases={0: 0},
        cost_estimate=pl.CostEstimate(
            flops=2 * rows * c,
            transcendentals=0,
            bytes_accessed=2 * rows * c * itemsize,
        ),
    )(main)

    if rem == 0:
        return main_out.reshape(orig_shape)

    # O(1 KiB) tail fixup; one concatenate instead of whole-array pad + slice.
    tail_out = jnp.round(jnp.maximum(flat[rows * c:], 0.0))
    return jnp.concatenate([main_out.reshape(-1), tail_out]).reshape(orig_shape)


if __name__ == "__main__":
    key = jax.random.PRNGKey(0)
    k0, k1, k2 = jax.random.split(key, 3)

    # Primary small NCHW input (canonical shape for the segmentation toy model).
    x = jax.random.normal(k0, (2, 4, 16, 16), dtype=jnp.float32) * 3.0
    ref = jnp.round(jnp.maximum(x, 0.0))
    # Default path (small-input bypass).
    out = jax.block_until_ready(segmentation_toy_model(x))
    assert out.shape == x.shape and out.dtype == x.dtype
    assert jnp.array_equal(out, ref), "mismatch vs reference (small input, bypass)"
    # Force the Pallas path on the same shape (single full-extent block).
    out_k = jax.block_until_ready(segmentation_toy_model(x, min_pallas_elements=0))
    assert jnp.array_equal(out_k, ref), "mismatch vs reference (small input, pallas)"

    # Ragged larger shape: exercises masked partial last block + tail fixup.
    x_ragged = jax.random.normal(k1, (1, 3, 211, 307), dtype=jnp.float32) * 2.5
    out_r = jax.block_until_ready(segmentation_toy_model(x_ragged))
    ref_r = jnp.round(jnp.maximum(x_ragged, 0.0))
    assert jnp.array_equal(out_r, ref_r), "mismatch vs reference (ragged input)"

    # Aligned larger shape: exercises the full 1024-row tiles / pipelined grid.
    x_big = jax.random.normal(k2, (1, 1, 2048, 1024), dtype=jnp.float32) * 4.0
    out_b = jax.block_until_ready(segmentation_toy_model(x_big))
    ref_b = jnp.round(jnp.maximum(x_big, 0.0))
    assert jnp.array_equal(out_b, ref_b), "mismatch vs reference (tiled input)"

    print("KERNEL_OK")
</pallas_src>

<mosaic_0001>
module attributes {stable_mosaic.version = 11 : i64} {
  func.func @_relu_round_kernel(%arg0: i32, %arg1: memref<2x1024xf32, #tpu.memory_space<vmem>>, %arg2: memref<2x1024xf32, #tpu.memory_space<vmem>>) attributes {dimension_semantics = [#tpu.dimension_semantics<parallel>], iteration_bounds = array<i64: 1>, scalar_prefetch = 0 : i64, scratch_operands = 0 : i64, tpu.core_type = #tpu.core_type<tc>, window_params = [{transform_indices = @transform_0, window_bounds = array<i64: 2, 1024>}, {transform_indices = @transform_1, window_bounds = array<i64: 2, 1024>}]} {
    %c0 = arith.constant 0 : index
    %c0_0 = arith.constant 0 : index
    %0 = vector.load %arg1[%c0, %c0_0] : memref<2x1024xf32, #tpu.memory_space<vmem>>, vector<2x1024xf32>
    %cst = arith.constant 0.000000e+00 : f32
    %1 = vector.broadcast %cst : f32 to vector<2x1024xf32>
    %2 = arith.maximumf %0, %1 : vector<2x1024xf32>
    %3 = math.roundeven %2 : vector<2x1024xf32>
    %c0_1 = arith.constant 0 : index
    %c0_2 = arith.constant 0 : index
    %4 = vector.load %arg2[%c0_1, %c0_2] : memref<2x1024xf32, #tpu.memory_space<vmem>>, vector<2x1024xf32>
    tpu.vector_store %arg2[%c0_1, %c0_2], %3 {strides = array<i32>} : memref<2x1024xf32, #tpu.memory_space<vmem>>, vector<2x1024xf32>,
    return
  }
  func.func @transform_0(%arg0: i32) -> (i32, i32) {
    %c0_i32 = arith.constant 0 : i32
    %c0_i32_0 = arith.constant 0 : i32
    return %arg0, %c0_i32 : i32, i32
  }
  func.func @transform_1(%arg0: i32) -> (i32, i32) {
    %c0_i32 = arith.constant 0 : i32
    %c0_i32_0 = arith.constant 0 : i32
    return %arg0, %c0_i32 : i32, i32
  }
}

</mosaic_0001>

<llo_original>
// kernel: tpu_custom_call.1
$region0: #{tpu_custom_call.1}
  #allocation0 [shape = 'u32[]', space=smem, size = 0x4, offset = 0x4, fixed_abs, tag = 'smem constant byte address 0x4 - core index']
  #allocation1 [shape = 'u32[72,128]{1,0:T(1,128)}', space=vmem, size = 0x9000, scoped, tag = 'internal scratch']
  %s0 = inlined_call_operand.hbm [shape: f32[2,1024], index: 0, kind: input, shape index: {}, may-alias: {0,1}]
  %s1 = inlined_call_operand.hbm [shape: f32[2,1024], index: 1, kind: output, shape index: {}, may-alias: {0,1}]
  %s2 = sld [smem:[#allocation0]]
  $region18: #{tpu_custom_call.1} parent=0
    _
  %s4 = ssub.s32 1, %s2
  %s5 = scalar_select 0, %s4, %s2
  $region1: #{tpu_custom_call.1} parent=0
    #allocation2 [shape = 'u8[8192]{0}', space=vmem, size = 0x2000, scoped, tag = 'input window, operand 0, single buffered']
    #allocation3 [shape = 's32[1]{0}', space=sflag, size = 0x4, scoped, tag = 'scoped memory for tpu_custom_call.1']
    #allocation4 [shape = 's32[1]{0}', space=sflag, size = 0x4, scoped, tag = 'scoped memory for tpu_custom_call.1']
    #allocation5 [shape = 'u8[8192]{0}', space=vmem, size = 0x2000, scoped, tag = 'output window, operand 0, single buffered']
    %6 = vsyncpa [#allocation3], 0
    %7 = vsyncpa [#allocation4], 0
    // Predicated region
    $region2: #{tpu_custom_call.1} parent=1 // pred_check
      _
    $region3: #{tpu_custom_call.1} parent=1 // pred_check_branch
      %9 = sbr.rel (0) target = $region5
    $region4: #{tpu_custom_call.1} parent=1 // pred_region
      %11 = vsyncadd [#allocation3], 0
      %s13 = sshll.u32 %s0, 4
      %s14 = int_to_ptr.hbm [resolvable:$true] %s13
      %s15 = sshll.u32 [#allocation2], 4
      %s16 = int_to_ptr.vmem [resolvable:$true] %s15
      %18 = dma.hbm_to_vmem [thread:$0]  %s14, 256, %s16, [#allocation3]
    $region5: #{tpu_custom_call.1} parent=1 // pred_fallthru
      _
    // Predicated region
    $region6: #{tpu_custom_call.1} parent=1 // pred_check
      _
    $region7: #{tpu_custom_call.1} parent=1 // pred_check_branch
      %20 = sbr.rel (0) target = $region9
    $region8: #{tpu_custom_call.1} parent=1 // pred_region
      %22 = dma.done [#allocation3], 256
    $region9: #{tpu_custom_call.1} parent=1 // pred_fallthru
      _
    %v23 = vld [vmem:[#allocation2] sm:$0xff]
    %v24 = vld [vmem:[#allocation2 + $0x8] sm:$0xff]
    %v25 = vmax.f32 %v23, 0.0
    %v26 = vmax.f32 %v24, 0.0
    %v27 = vround.ne.pseudo %v25
    %v28 = vround.ne.pseudo %v26
    %29 = vst [vmem:[#allocation5] sm:$0xff] %v27
    %30 = vst [vmem:[#allocation5 + $0x8] sm:$0xff] %v28
    // Predicated region
    $region10: #{tpu_custom_call.1} parent=1 // pred_check
      _
    $region11: #{tpu_custom_call.1} parent=1 // pred_check_branch
      %32 = sbr.rel (0) target = $region13
    $region12: #{tpu_custom_call.1} parent=1 // pred_region
      %34 = vsyncadd [#allocation4], 0
      %s36 = sshll.u32 [#allocation5], 4
      %s37 = int_to_ptr.vmem [resolvable:$true] %s36
      %s38 = sshll.u32 %s1, 4
      %s39 = int_to_ptr.hbm [resolvable:$true] %s38
      %41 = dma.vmem_to_hbm [thread:$0]  %s37, 256, %s39, [#allocation4]
    $region13: #{tpu_custom_call.1} parent=1 // pred_fallthru
      _
    // Predicated region
    $region14: #{tpu_custom_call.1} parent=1 // pred_check
      _
    $region15: #{tpu_custom_call.1} parent=1 // pred_check_branch
      %43 = sbr.rel (0) target = $region17
    $region16: #{tpu_custom_call.1} parent=1 // pred_region
      %45 = dma.done [#allocation4], 256
    $region17: #{tpu_custom_call.1} parent=1 // pred_fallthru
      _
    %46 = vsyncpa [#allocation3], 1
    %47 = vsyncpa [#allocation4], 1

</llo_original>
